<compile_context>
chip_gen: v6e
topology: v6e:2x2x1
jax: 0.10.0
libtpu: 0.0.40
codegen_flags: <defaults>
</compile_context>

<pallas_src>
import functools

import jax
import jax.numpy as jnp
from jax import lax
from jax.experimental import pallas as pl
from jax.experimental.pallas import tpu as pltpu


_NEG_INF = -1e30  # finite "minus infinity" (avoids inf-inf NaNs)


def _round_up(x, m):
    return (x + m - 1) // m * m


def _lm_target_kernel(x_ref, w_ref, tgt_ref, seg_ref, nll_ref,
                      m_sc, l_sc, t_sc, *, vocab_size, vt):
    # x_ref:   [Nt, H]  bf16   hidden-state tile (resident across vocab sweep)
    # w_ref:   [Vt, H]  bf16   weight tile in original nn.Linear [V, H] layout
    # tgt_ref: [Nt, 1]  i32    target ids
    # seg_ref: [Nt, 1]  i32    segment ids (loss where seg > 0)
    # nll_ref: [Nt, 1]  f32    per-token masked NLL (written at last vocab step)
    # m_sc/l_sc/t_sc: [Nt, 1] f32 running max / sum-exp / target-logit
    v = pl.program_id(1)

    @pl.when(v == 0)
    def _init():
        m_sc[...] = jnp.full_like(m_sc, _NEG_INF)
        l_sc[...] = jnp.zeros_like(l_sc)
        t_sc[...] = jnp.zeros_like(t_sc)

    # MXU: [Nt, Vt] f32 block, contracting on H (no pre-transposed weight).
    logits = lax.dot_general(
        x_ref[...], w_ref[...],
        dimension_numbers=(((1,), (1,)), ((), ())),
        preferred_element_type=jnp.float32)

    # Global vocab ids of this tile's columns; mask vocab padding.
    vocab_ids = v * vt + lax.broadcasted_iota(jnp.int32, logits.shape, 1)
    logits = jnp.where(vocab_ids < vocab_size, logits, _NEG_INF)

    # Target logit for target ids falling in this vocab tile (masked sum,
    # no one-hot float gather, no logp materialization).
    tgt = tgt_ref[...]  # [Nt, 1]
    t_sc[...] += jnp.sum(jnp.where(vocab_ids == tgt, logits, 0.0),
                         axis=-1, keepdims=True)

    # Online logsumexp update.
    m_prev = m_sc[...]
    m_new = jnp.maximum(m_prev, jnp.max(logits, axis=-1, keepdims=True))
    l_sc[...] = (l_sc[...] * jnp.exp(m_prev - m_new)
                 + jnp.sum(jnp.exp(logits - m_new), axis=-1, keepdims=True))
    m_sc[...] = m_new

    @pl.when(v == pl.num_programs(1) - 1)
    def _finalize():
        mask = (seg_ref[...] > 0).astype(jnp.float32)
        lse = m_sc[...] + jnp.log(l_sc[...])
        nll_ref[...] = (lse - t_sc[...]) * mask  # masked per-token NLL


def lm_target_loss(memory_bank, tgt, seg, weight, *, nt=256, vt=512):
    """memory_bank: [B,S,H], tgt/seg: [B,S] int, weight: [V,H] (nn.Linear)."""
    B, S, H = memory_bank.shape
    V = weight.shape[0]
    N = B * S

    # Tile sizes: sublane-aligned (multiples of 8), clipped to padded extents.
    n_pad = _round_up(N, 8)
    nt = min(nt, n_pad)
    n_pad = _round_up(N, nt)
    v_pad = _round_up(V, 128)
    vt = min(vt, v_pad)
    v_pad = _round_up(V, vt)
    gn = n_pad // nt
    gv = v_pad // vt

    # Flatten / pad / cast. Matmul operands go in as bf16 (halves the HBM
    # bytes of the dominant V x H weight stream); accumulation stays f32.
    x = memory_bank.reshape(N, H).astype(jnp.bfloat16)
    x = jnp.pad(x, ((0, n_pad - N), (0, 0)))
    w = weight.astype(jnp.bfloat16)                    # [V, H], NOT transposed
    w = jnp.pad(w, ((0, v_pad - V), (0, 0)))
    tgt2 = jnp.pad(tgt.reshape(N).astype(jnp.int32),
                   (0, n_pad - N)).reshape(n_pad, 1)
    seg2 = jnp.pad(seg.reshape(N).astype(jnp.int32),
                   (0, n_pad - N)).reshape(n_pad, 1)   # padded rows masked out

    kernel = functools.partial(_lm_target_kernel, vocab_size=V, vt=vt)

    nll = pl.pallas_call(
        kernel,
        out_shape=jax.ShapeDtypeStruct((n_pad, 1), jnp.float32),
        grid_spec=pltpu.PrefetchScalarGridSpec(
            num_scalar_prefetch=0,
            grid=(gn, gv),
            in_specs=[
                # x / tgt / seg blocks keep the same index across the vocab
                # sweep -> fetched once per token tile.
                pl.BlockSpec((nt, H), lambda i, v: (i, 0)),
                # weight streams over vocab tiles.
                pl.BlockSpec((vt, H), lambda i, v: (v, 0)),
                pl.BlockSpec((nt, 1), lambda i, v: (i, 0)),
                pl.BlockSpec((nt, 1), lambda i, v: (i, 0)),
            ],
            out_specs=pl.BlockSpec((nt, 1), lambda i, v: (i, 0)),
            scratch_shapes=[
                pltpu.VMEM((nt, 1), jnp.float32),   # running max m
                pltpu.VMEM((nt, 1), jnp.float32),   # running sum-exp l
                pltpu.VMEM((nt, 1), jnp.float32),   # running target logit
            ],
        ),
        compiler_params=pltpu.CompilerParams(
            dimension_semantics=("parallel", "arbitrary"),
            vmem_limit_bytes=32 * 1024 * 1024,
        ),
        cost_estimate=pl.CostEstimate(
            flops=2 * n_pad * v_pad * H,
            transcendentals=n_pad * v_pad,
            bytes_accessed=(x.size * 2 + gn * w.size * 2
                            + tgt2.size * 4 + seg2.size * 4 + n_pad * 4),
        ),
    )(x, w, tgt2, seg2)

    total = jnp.sum(nll)
    count = jnp.sum((seg > 0).astype(jnp.float32))
    # NLLLoss(reduction='mean') over selected tokens; guard empty selection.
    return total / jnp.maximum(count, 1.0)


def _reference_loss(memory_bank, tgt, seg, weight):
    """Pure-JAX reference mirroring the PyTorch module (f32 everywhere)."""
    H = memory_bank.shape[-1]
    x = memory_bank.reshape(-1, H)
    t = tgt.reshape(-1)
    keep = seg.reshape(-1) > 0
    logits = x @ weight.T
    logp = jax.nn.log_softmax(logits, axis=-1)
    nll = -jnp.take_along_axis(logp, t[:, None], axis=-1)[:, 0]
    total = jnp.sum(jnp.where(keep, nll, 0.0))
    count = jnp.sum(keep.astype(jnp.float32))
    return total / count


if __name__ == "__main__":
    # Small shapes: batch=2, seq=7, hidden=32, vocab=60 (odd sizes exercise
    # both token padding and vocab-tile padding/masking).
    B, S, H, V = 2, 7, 32, 60

    key = jax.random.PRNGKey(0)
    k_mb, k_w, k_tgt, k_seg = jax.random.split(key, 4)

    memory_bank = jax.random.normal(k_mb, (B, S, H), dtype=jnp.float32)
    # deterministic nn.Linear(hidden_size, vocab_size, bias=False) weight [V, H]
    weight = jax.random.normal(k_w, (V, H), dtype=jnp.float32) * 0.02
    tgt = jax.random.randint(k_tgt, (B, S), 0, V, dtype=jnp.int32)
    seg = jax.random.randint(k_seg, (B, S), 0, 3, dtype=jnp.int32)
    seg = seg.at[0, 0].set(1)  # ensure at least one selected token

    ref = _reference_loss(memory_bank, tgt, seg, weight)

    # 1) Multi-tile path: grid = (2 token tiles, 2 vocab tiles) exercises the
    #    online logsumexp across vocab tiles and padding masks.
    loss_tiled = lm_target_loss(memory_bank, tgt, seg, weight, nt=8, vt=32)
    jax.block_until_ready(loss_tiled)
    assert jnp.allclose(loss_tiled, ref, rtol=1e-2, atol=1e-2), (loss_tiled, ref)

    # 2) Default (large) tiles collapse to a single grid step; same semantics.
    loss_big = lm_target_loss(memory_bank, tgt, seg, weight)
    jax.block_until_ready(loss_big)
    assert jnp.allclose(loss_big, ref, rtol=1e-2, atol=1e-2), (loss_big, ref)

    print("KERNEL_OK")
</pallas_src>

<mosaic_0001>
module attributes {stable_mosaic.version = 11 : i64} {
  func.func @_lm_target_kernel(%arg0: i32, %arg1: i32, %arg2: memref<8x32xbf16, #tpu.memory_space<vmem>>, %arg3: memref<32x32xbf16, #tpu.memory_space<vmem>>, %arg4: memref<8x1xi32, #tpu.memory_space<vmem>>, %arg5: memref<8x1xi32, #tpu.memory_space<vmem>>, %arg6: memref<8x1xf32, #tpu.memory_space<vmem>>, %arg7: memref<8x1xf32, #tpu.memory_space<vmem>>, %arg8: memref<8x1xf32, #tpu.memory_space<vmem>>, %arg9: memref<8x1xf32, #tpu.memory_space<vmem>>) attributes {dimension_semantics = [#tpu.dimension_semantics<parallel>, #tpu.dimension_semantics<arbitrary>], iteration_bounds = array<i64: 2, 2>, scalar_prefetch = 0 : i64, scratch_operands = 3 : i64, tpu.core_type = #tpu.core_type<tc>, window_params = [{transform_indices = @transform_0, window_bounds = array<i64: 8, 32>}, {transform_indices = @transform_1, window_bounds = array<i64: 32, 32>}, {transform_indices = @transform_2, window_bounds = array<i64: 8, 1>}, {transform_indices = @transform_3, window_bounds = array<i64: 8, 1>}, {transform_indices = @transform_4, window_bounds = array<i64: 8, 1>}]} {
    %c0_i32 = arith.constant 0 : i32
    %0 = arith.cmpi eq, %arg1, %c0_i32 : i32
    %1 = arith.extui %0 : i1 to i32
    %c0_i32_0 = arith.constant 0 : i32
    %2 = arith.cmpi ne, %1, %c0_i32_0 : i32
    scf.if %2 {
      %cst_24 = arith.constant -1.000000e+30 : f32
      %43 = vector.broadcast %cst_24 : f32 to vector<8x1xf32>
      %c0_25 = arith.constant 0 : index
      %c0_26 = arith.constant 0 : index
      %44 = vector.load %arg7[%c0_25, %c0_26] : memref<8x1xf32, #tpu.memory_space<vmem>>, vector<8x1xf32>
      tpu.vector_store %arg7[%c0_25, %c0_26], %43 {strides = array<i32>} : memref<8x1xf32, #tpu.memory_space<vmem>>, vector<8x1xf32>,
      %cst_27 = arith.constant 0.000000e+00 : f32
      %45 = vector.broadcast %cst_27 : f32 to vector<8x1xf32>
      %c0_28 = arith.constant 0 : index
      %c0_29 = arith.constant 0 : index
      %46 = vector.load %arg8[%c0_28, %c0_29] : memref<8x1xf32, #tpu.memory_space<vmem>>, vector<8x1xf32>
      tpu.vector_store %arg8[%c0_28, %c0_29], %45 {strides = array<i32>} : memref<8x1xf32, #tpu.memory_space<vmem>>, vector<8x1xf32>,
      %cst_30 = arith.constant 0.000000e+00 : f32
      %47 = vector.broadcast %cst_30 : f32 to vector<8x1xf32>
      %c0_31 = arith.constant 0 : index
      %c0_32 = arith.constant 0 : index
      %48 = vector.load %arg9[%c0_31, %c0_32] : memref<8x1xf32, #tpu.memory_space<vmem>>, vector<8x1xf32>
      tpu.vector_store %arg9[%c0_31, %c0_32], %47 {strides = array<i32>} : memref<8x1xf32, #tpu.memory_space<vmem>>, vector<8x1xf32>,
    } else {
    }
    %c0 = arith.constant 0 : index
    %c0_1 = arith.constant 0 : index
    %3 = vector.load %arg2[%c0, %c0_1] : memref<8x32xbf16, #tpu.memory_space<vmem>>, vector<8x32xbf16>
    %c0_2 = arith.constant 0 : index
    %c0_3 = arith.constant 0 : index
    %4 = vector.load %arg3[%c0_2, %c0_3] : memref<32x32xbf16, #tpu.memory_space<vmem>>, vector<32x32xbf16>
    %cst = arith.constant dense<0.000000e+00> : vector<8x32xf32>
    %5 = tpu.matmul %3, %4, %cst {dimension_numbers = #tpu.dot_dimension_numbers<[1], [1], [0], [0], [0, 0, 1, 0], [], []>} : vector<8x32xbf16>, vector<32x32xbf16>, vector<8x32xf32> -> vector<8x32xf32>
    %c32_i32 = arith.constant 32 : i32
    %6 = arith.muli %arg1, %c32_i32 : i32
    %7 = tpu.iota {dimensions = array<i32: 1>} : vector<8x32xi32>
    %8 = vector.broadcast %6 : i32 to vector<8x32xi32>
    %9 = arith.addi %8, %7 : vector<8x32xi32>
    %c60_i32 = arith.constant 60 : i32
    %10 = vector.broadcast %c60_i32 : i32 to vector<8x32xi32>
    %11 = arith.cmpi slt, %9, %10 : vector<8x32xi32>
    %cst_4 = arith.constant -1.000000e+30 : f32
    %12 = vector.broadcast %cst_4 : f32 to vector<8x32xf32>
    %13 = arith.select %11, %5, %12 : vector<8x32xi1>, vector<8x32xf32>
    %c0_5 = arith.constant 0 : index
    %c0_6 = arith.constant 0 : index
    %14 = vector.load %arg4[%c0_5, %c0_6] : memref<8x1xi32, #tpu.memory_space<vmem>>, vector<8x1xi32>
    %c0_7 = arith.constant 0 : index
    %c0_8 = arith.constant 0 : index
    %15 = vector.load %arg9[%c0_7, %c0_8] : memref<8x1xf32, #tpu.memory_space<vmem>>, vector<8x1xf32>
    %16 = vector.broadcast %14 : vector<8x1xi32> to vector<8x32xi32>
    %17 = arith.cmpi eq, %9, %16 : vector<8x32xi32>
    %cst_9 = arith.constant 0.000000e+00 : f32
    %18 = vector.broadcast %cst_9 : f32 to vector<8x32xf32>
    %19 = arith.select %17, %13, %18 : vector<8x32xi1>, vector<8x32xf32>
    %cst_10 = arith.constant dense<0.000000e+00> : vector<8xf32>
    %20 = vector.multi_reduction <add>, %19, %cst_10 [1] : vector<8x32xf32> to vector<8xf32>
    %21 = vector.shape_cast %20 : vector<8xf32> to vector<8x1xf32>
    %22 = arith.addf %15, %21 : vector<8x1xf32>
    %c0_11 = arith.constant 0 : index
    %c0_12 = arith.constant 0 : index
    %23 = vector.load %arg9[%c0_11, %c0_12] : memref<8x1xf32, #tpu.memory_space<vmem>>, vector<8x1xf32>
    tpu.vector_store %arg9[%c0_11, %c0_12], %22 {strides = array<i32>} : memref<8x1xf32, #tpu.memory_space<vmem>>, vector<8x1xf32>,
    %c0_13 = arith.constant 0 : index
    %c0_14 = arith.constant 0 : index
    %24 = vector.load %arg7[%c0_13, %c0_14] : memref<8x1xf32, #tpu.memory_space<vmem>>, vector<8x1xf32>
    %cst_15 = arith.constant dense<0xFF800000> : vector<8xf32>
    %25 = vector.multi_reduction <maximumf>, %13, %cst_15 [1] : vector<8x32xf32> to vector<8xf32>
    %26 = vector.shape_cast %25 : vector<8xf32> to vector<8x1xf32>
    %27 = arith.maximumf %24, %26 : vector<8x1xf32>
    %c0_16 = arith.constant 0 : index
    %c0_17 = arith.constant 0 : index
    %28 = vector.load %arg8[%c0_16, %c0_17] : memref<8x1xf32, #tpu.memory_space<vmem>>, vector<8x1xf32>
    %29 = arith.subf %24, %27 : vector<8x1xf32>
    %30 = math.exp %29 : vector<8x1xf32>
    %31 = arith.mulf %28, %30 : vector<8x1xf32>
    %32 = vector.broadcast %27 : vector<8x1xf32> to vector<8x32xf32>
    %33 = arith.subf %13, %32 : vector<8x32xf32>
    %34 = math.exp %33 : vector<8x32xf32>
    %cst_18 = arith.constant dense<0.000000e+00> : vector<8xf32>
    %35 = vector.multi_reduction <add>, %34, %cst_18 [1] : vector<8x32xf32> to vector<8xf32>
    %36 = vector.shape_cast %35 : vector<8xf32> to vector<8x1xf32>
    %37 = arith.addf %31, %36 : vector<8x1xf32>
    %c0_19 = arith.constant 0 : index
    %c0_20 = arith.constant 0 : index
    %38 = vector.load %arg8[%c0_19, %c0_20] : memref<8x1xf32, #tpu.memory_space<vmem>>, vector<8x1xf32>
    tpu.vector_store %arg8[%c0_19, %c0_20], %37 {strides = array<i32>} : memref<8x1xf32, #tpu.memory_space<vmem>>, vector<8x1xf32>,
    %c0_21 = arith.constant 0 : index
    %c0_22 = arith.constant 0 : index
    %39 = vector.load %arg7[%c0_21, %c0_22] : memref<8x1xf32, #tpu.memory_space<vmem>>, vector<8x1xf32>
    tpu.vector_store %arg7[%c0_21, %c0_22], %27 {strides = array<i32>} : memref<8x1xf32, #tpu.memory_space<vmem>>, vector<8x1xf32>,
    %c1_i32 = arith.constant 1 : i32
    %40 = arith.cmpi eq, %arg1, %c1_i32 : i32
    %41 = arith.extui %40 : i1 to i32
    %c0_i32_23 = arith.constant 0 : i32
    %42 = arith.cmpi ne, %41, %c0_i32_23 : i32
    scf.if %42 {
      %c0_24 = arith.constant 0 : index
      %c0_25 = arith.constant 0 : index
      %43 = vector.load %arg5[%c0_24, %c0_25] : memref<8x1xi32, #tpu.memory_space<vmem>>, vector<8x1xi32>
      %c0_i32_26 = arith.constant 0 : i32
      %44 = vector.broadcast %c0_i32_26 : i32 to vector<8x1xi32>
      %45 = arith.cmpi sgt, %43, %44 : vector<8x1xi32>
      %46 = arith.extui %45 : vector<8x1xi1> to vector<8x1xi32>
      %47 = arith.sitofp %46 : vector<8x1xi32> to vector<8x1xf32>
      %c0_27 = arith.constant 0 : index
      %c0_28 = arith.constant 0 : index
      %48 = vector.load %arg7[%c0_27, %c0_28] : memref<8x1xf32, #tpu.memory_space<vmem>>, vector<8x1xf32>
      %c0_29 = arith.constant 0 : index
      %c0_30 = arith.constant 0 : index
      %49 = vector.load %arg8[%c0_29, %c0_30] : memref<8x1xf32, #tpu.memory_space<vmem>>, vector<8x1xf32>
      %50 = math.log %49 : vector<8x1xf32>
      %51 = arith.addf %48, %50 : vector<8x1xf32>
      %c0_31 = arith.constant 0 : index
      %c0_32 = arith.constant 0 : index
      %52 = vector.load %arg9[%c0_31, %c0_32] : memref<8x1xf32, #tpu.memory_space<vmem>>, vector<8x1xf32>
      %53 = arith.subf %51, %52 : vector<8x1xf32>
      %54 = arith.mulf %53, %47 : vector<8x1xf32>
      %c0_33 = arith.constant 0 : index
      %c0_34 = arith.constant 0 : index
      %55 = vector.load %arg6[%c0_33, %c0_34] : memref<8x1xf32, #tpu.memory_space<vmem>>, vector<8x1xf32>
      tpu.vector_store %arg6[%c0_33, %c0_34], %54 {strides = array<i32>} : memref<8x1xf32, #tpu.memory_space<vmem>>, vector<8x1xf32>,
    } else {
    }
    return
  }
  func.func @transform_0(%arg0: i32, %arg1: i32) -> (i32, i32) {
    %c0_i32 = arith.constant 0 : i32
    %c0_i32_0 = arith.constant 0 : i32
    return %arg0, %c0_i32 : i32, i32
  }
  func.func @transform_1(%arg0: i32, %arg1: i32) -> (i32, i32) {
    %c0_i32 = arith.constant 0 : i32
    %c0_i32_0 = arith.constant 0 : i32
    return %arg1, %c0_i32 : i32, i32
  }
  func.func @transform_2(%arg0: i32, %arg1: i32) -> (i32, i32) {
    %c0_i32 = arith.constant 0 : i32
    %c0_i32_0 = arith.constant 0 : i32
    return %arg0, %c0_i32 : i32, i32
  }
  func.func @transform_3(%arg0: i32, %arg1: i32) -> (i32, i32) {
    %c0_i32 = arith.constant 0 : i32
    %c0_i32_0 = arith.constant 0 : i32
    return %arg0, %c0_i32 : i32, i32
  }
  func.func @transform_4(%arg0: i32, %arg1: i32) -> (i32, i32) {
    %c0_i32 = arith.constant 0 : i32
    %c0_i32_0 = arith.constant 0 : i32
    return %arg0, %c0_i32 : i32, i32
  }
}

</mosaic_0001>

<llo_original>
// kernel: tpu_custom_call.1
$region0: #{tpu_custom_call.1}
  #allocation0 [shape = 'u32[]', space=smem, size = 0x4, offset = 0x4, fixed_abs, tag = 'smem constant byte address 0x4 - core index']
  #allocation1 [shape = 'u32[144,128]{1,0:T(1,128)}', space=vmem, size = 0x12000, scoped, tag = 'internal scratch']
  #allocation2 [shape = 'f32[8,1]{1,0:T(8,128)}', space=vmem, size = 0x1000, scoped, tag = 'scratch operand']
  #allocation3 [shape = 'f32[8,1]{1,0:T(8,128)}', space=vmem, size = 0x1000, scoped, tag = 'scratch operand']
  #allocation4 [shape = 'f32[8,1]{1,0:T(8,128)}', space=vmem, size = 0x1000, scoped, tag = 'scratch operand']
  %s0 = inlined_call_operand.vmem [shape: bf16[16,32], index: 0, kind: input, shape index: {}]
  %s1 = inlined_call_operand.vmem [shape: bf16[64,32], index: 1, kind: input, shape index: {}]
  %s2 = inlined_call_operand.vmem [shape: s32[16,1], index: 2, kind: input, shape index: {}]
  %s3 = inlined_call_operand.vmem [shape: s32[16,1], index: 3, kind: input, shape index: {}]
  %s4 = inlined_call_operand.vmem [shape: f32[16,1], index: 4, kind: output, shape index: {}]
  %s5 = sld [smem:[#allocation0]]
  $region57: #{tpu_custom_call.1} parent=0
    _
  %s7 = ssub.s32 1, %s5
  %s8 = scalar_select 0, %s7, %s5
  loop: start=0, step=1, limit=6
  $region2: #{tpu_custom_call.1} parent=0 // loop_pre_header
    _
  $region3: #{tpu_custom_call.1} parent=0 // loop_header
    %s10 = sphi 0, %s14
    %p11 = scmp.ge.s32.totalorder %s10, 6
    %s17 = sphi 0, %s29
    %s18 = sphi 0, %s25
    %s19 = sphi 0, %s17
    %s20 = sphi 0, %s18
    %s21 = sphi 0, %s19
    %s22 = sphi 0, %s20
    %s32 = sphi 0, %s34
    %s35 = sphi 0, %s32
    %s36 = sphi 0, %s35
    %s52 = sphi 0, %s36
    %s58 = sphi 0, %s60
    %s61 = sphi 0, %s58
    %s62 = sphi 0, %s61
    %s78 = sphi 0, %s62
    %s84 = sphi 0, %s86
    %s87 = sphi 0, %s84
    %s88 = sphi 0, %s87
    %s104 = sphi 0, %s88
    %s110 = sphi 0, %s112
    %s113 = sphi 0, %s110
    %s114 = sphi 0, %s113
    %s130 = sphi 0, %s114
    %s136 = sphi 0, %s138
    %s139 = sphi 0, %s136
    %s140 = sphi 0, %s139
    %s156 = sphi 0, %s140
  $region4: #{tpu_custom_call.1} parent=0 // loop_header_branch
    %13 = sbr.rel (%p11) target = $region8
  $region5: #{tpu_custom_call.1} parent=0 // loop_body
    %s15 = ssub.s32 %s10, 1
    %s16 = ssub.s32 %s10, 2
    %s23 = sadd.s32 1, %s18
    %p24 = scmp.ge.s32.totalorder %s23, 2
    %s25 = scalar_select %p24, 0, %s23
    %s26 = sadd.s32 1, %s17
    %s27 = scalar_select %p24, %s26, %s17
    %p28 = scmp.ge.s32.totalorder %s27, 2
    %s29 = scalar_select %p28, 0, %s27
    %s30 = ssub.s32 %s17, %s29
    %p31 = scmp.eq.s32.totalorder %s30, 0
    %s33 = sadd.s32 %s32, 1
    %s34 = scalar_select %p31, %s32, %s33
    %p37 = pneg %p31
    %p38 = scmp.eq.s32.totalorder %s10, 3
    %p39 = por %p37, %p38
    %p40 = scmp.ne.s32.totalorder %s32, %s35
    %p41 = scmp.eq.s32.totalorder %s10, 0
    %p42 = por %p40, %p41
    %p43 = scmp.ne.s32.totalorder %s32, %s35
    %p44 = scmp.eq.s32.totalorder %s15, 3
    %p45 = por %p43, %p44
    %p46 = scmp.ne.s32.totalorder %s35, %s36
    %p47 = scmp.eq.s32.totalorder %s15, 0
    %p48 = por %p46, %p47
    %p49 = scmp.ne.s32.totalorder %s35, %s36
    %p50 = scmp.eq.s32.totalorder %s16, 3
    %p51 = por %p49, %p50
    %p53 = scmp.ne.s32.totalorder %s36, %s52
    %p54 = scmp.eq.s32.totalorder %s16, 0
    %p55 = por %p53, %p54
    %s56 = ssub.s32 %s18, %s25
    %p57 = scmp.eq.s32.totalorder %s56, 0
    %s59 = sadd.s32 %s58, 1
    %s60 = scalar_select %p57, %s58, %s59
    %p63 = pneg %p57
    %p64 = scmp.eq.s32.totalorder %s10, 3
    %p65 = por %p63, %p64
    %p66 = scmp.ne.s32.totalorder %s58, %s61
    %p67 = scmp.eq.s32.totalorder %s10, 0
    %p68 = por %p66, %p67
    %p69 = scmp.ne.s32.totalorder %s58, %s61
    %p70 = scmp.eq.s32.totalorder %s15, 3
    %p71 = por %p69, %p70
    %p72 = scmp.ne.s32.totalorder %s61, %s62
    %p73 = scmp.eq.s32.totalorder %s15, 0
    %p74 = por %p72, %p73
    %p75 = scmp.ne.s32.totalorder %s61, %s62
    %p76 = scmp.eq.s32.totalorder %s16, 3
    %p77 = por %p75, %p76
    %p79 = scmp.ne.s32.totalorder %s62, %s78
    %p80 = scmp.eq.s32.totalorder %s16, 0
    %p81 = por %p79, %p80
    %s82 = ssub.s32 %s17, %s29
    %p83 = scmp.eq.s32.totalorder %s82, 0
    %s85 = sadd.s32 %s84, 1
    %s86 = scalar_select %p83, %s84, %s85
    %p89 = pneg %p83
    %p90 = scmp.eq.s32.totalorder %s10, 3
    %p91 = por %p89, %p90
    %p92 = scmp.ne.s32.totalorder %s84, %s87
    %p93 = scmp.eq.s32.totalorder %s10, 0
    %p94 = por %p92, %p93
    %p95 = scmp.ne.s32.totalorder %s84, %s87
    %p96 = scmp.eq.s32.totalorder %s15, 3
    %p97 = por %p95, %p96
    %p98 = scmp.ne.s32.totalorder %s87, %s88
    %p99 = scmp.eq.s32.totalorder %s15, 0
    %p100 = por %p98, %p99
    %p101 = scmp.ne.s32.totalorder %s87, %s88
    %p102 = scmp.eq.s32.totalorder %s16, 3
    %p103 = por %p101, %p102
    %p105 = scmp.ne.s32.totalorder %s88, %s104
    %p106 = scmp.eq.s32.totalorder %s16, 0
    %p107 = por %p105, %p106
    %s108 = ssub.s32 %s17, %s29
    %p109 = scmp.eq.s32.totalorder %s108, 0
    %s111 = sadd.s32 %s110, 1
    %s112 = scalar_select %p109, %s110, %s111
    %p115 = pneg %p109
    %p116 = scmp.eq.s32.totalorder %s10, 3
    %p117 = por %p115, %p116
    %p118 = scmp.ne.s32.totalorder %s110, %s113
    %p119 = scmp.eq.s32.totalorder %s10, 0
    %p120 = por %p118, %p119
    %p121 = scmp.ne.s32.totalorder %s110, %s113
    %p122 = scmp.eq.s32.totalorder %s15, 3
    %p123 = por %p121, %p122
    %p124 = scmp.ne.s32.totalorder %s113, %s114
    %p125 = scmp.eq.s32.totalorder %s15, 0
    %p126 = por %p124, %p125
    %p127 = scmp.ne.s32.totalorder %s113, %s114
    %p128 = scmp.eq.s32.totalorder %s16, 3
    %p129 = por %p127, %p128
    %p131 = scmp.ne.s32.totalorder %s114, %s130
    %p132 = scmp.eq.s32.totalorder %s16, 0
    %p133 = por %p131, %p132
    %s134 = ssub.s32 %s17, %s29
    %p135 = scmp.eq.s32.totalorder %s134, 0
    %s137 = sadd.s32 %s136, 1
    %s138 = scalar_select %p135, %s136, %s137
    %p141 = pneg %p135
    %p142 = scmp.eq.s32.totalorder %s10, 3
    %p143 = por %p141, %p142
    %p144 = scmp.ne.s32.totalorder %s136, %s139
    %p145 = scmp.eq.s32.totalorder %s10, 0
    %p146 = por %p144, %p145
    %p147 = scmp.ne.s32.totalorder %s136, %s139
    %p148 = scmp.eq.s32.totalorder %s15, 3
    %p149 = por %p147, %p148
    %p150 = scmp.ne.s32.totalorder %s139, %s140
    %p151 = scmp.eq.s32.totalorder %s15, 0
    %p152 = por %p150, %p151
    %p153 = scmp.ne.s32.totalorder %s139, %s140
    %p154 = scmp.eq.s32.totalorder %s16, 3
    %p155 = por %p153, %p154
    %p157 = scmp.ne.s32.totalorder %s140, %s156
    %p158 = scmp.eq.s32.totalorder %s16, 0
    %p159 = por %p157, %p158
    %p160 = scmp.le.s32.totalorder 1, %s10
    %p161 = scmp.lt.s32.totalorder %s10, 5
    %p162 = pnand %p160, %p161
    %p163 = pneg %p162
    // Predicated region
    $region9: #{tpu_custom_call.1} parent=5 // pred_check
      _
    $region10: #{tpu_custom_call.1} parent=5 // pred_check_branch
      %165 = sbr.rel (%p162) target = $region12
    $region11: #{tpu_custom_call.1} parent=5 // pred_region
      %s166 = ssub.s32 %s10, 1
    $region12: #{tpu_custom_call.1} parent=5 // pred_fallthru
      _
    %p167 = scmp.lt.s32.totalorder %s10, 4
    // Predicated region
    $region13: #{tpu_custom_call.1} parent=5 // pred_check
      %p168 = pneg %p167
    $region14: #{tpu_custom_call.1} parent=5 // pred_check_branch
      %170 = sbr.rel (%p168) target = $region16
    $region15: #{tpu_custom_call.1} parent=5 // pred_region
      // Predicated region
      $region17: #{tpu_custom_call.1} parent=15 // pred_check
        %p171 = pneg %p42
      $region18: #{tpu_custom_call.1} parent=15 // pred_check_branch
        %173 = sbr.rel (%p171) target = $region20
      $region19: #{tpu_custom_call.1} parent=15 // pred_region
        %p174 = scmp.lt.s32.totalorder %s17, 1
        %s175 = scalar_select %p174, %s17, 1
        %s176 = smul.addr %s175, 4
        %s177 = scalar_lea.vmem %s0, %s176
      $region20: #{tpu_custom_call.1} parent=15 // pred_fallthru
        _
      // Predicated region
      $region21: #{tpu_custom_call.1} parent=15 // pred_check
        %p178 = pneg %p68
      $region22: #{tpu_custom_call.1} parent=15 // pred_check_branch
        %180 = sbr.rel (%p178) target = $region24
      $region23: #{tpu_custom_call.1} parent=15 // pred_region
        %s181 = smul.u32 4, %s18
        %p182 = scmp.lt.s32.totalorder %s181, 7
        %s183 = scalar_select %p182, %s181, 7
        %s184 = smul.addr %s183, 4
        %s185 = scalar_lea.vmem %s1, %s184
        %s186 = smul.u32 4, %s18
      $region24: #{tpu_custom_call.1} parent=15 // pred_fallthru
        _
      // Predicated region
      $region25: #{tpu_custom_call.1} parent=15 // pred_check
        %p187 = pneg %p94
      $region26: #{tpu_custom_call.1} parent=15 // pred_check_branch
        %189 = sbr.rel (%p187) target = $region28
      $region27: #{tpu_custom_call.1} parent=15 // pred_region
        %p190 = scmp.lt.s32.totalorder %s17, 1
        %s191 = scalar_select %p190, %s17, 1
        %s192 = smul.addr %s191, 8
        %s193 = scalar_lea.vmem %s2, %s192
      $region28: #{tpu_custom_call.1} parent=15 // pred_fallthru
        _
      // Predicated region
      $region29: #{tpu_custom_call.1} parent=15 // pred_check
        %p194 = pneg %p120
      $region30: #{tpu_custom_call.1} parent=15 // pred_check_branch
        %196 = sbr.rel (%p194) target = $region32
      $region31: #{tpu_custom_call.1} parent=15 // pred_region
        %p197 = scmp.lt.s32.totalorder %s17, 1
        %s198 = scalar_select %p197, %s17, 1
        %s199 = smul.addr %s198, 8
        %s200 = scalar_lea.vmem %s3, %s199
      $region32: #{tpu_custom_call.1} parent=15 // pred_fallthru
        _
    $region16: #{tpu_custom_call.1} parent=5 // pred_fallthru
      _
    %p201 = scmp.le.s32.totalorder 1, %s10
    %p202 = scmp.lt.s32.totalorder %s10, 5
    %p203 = pnand %p201, %p202
    %p204 = pneg %p203
    // Predicated region
    $region33: #{tpu_custom_call.1} parent=5 // pred_check
      _
    $region34: #{tpu_custom_call.1} parent=5 // pred_check_branch
      %206 = sbr.rel (%p203) target = $region36
    $region35: #{tpu_custom_call.1} parent=5 // pred_region
      %s207 = ssub.s32 %s10, 1
      %p208 = scmp.lt.s32.totalorder %s19, 1
      %s209 = scalar_select %p208, %s19, 1
      %s210 = smul.addr %s209, 4
      %s211 = scalar_lea.vmem %s0, %s210
      %p212 = pneg %p48
      %p213 = pneg %p45
      %s214 = smul.u32 4, %s20
      %p215 = scmp.lt.s32.totalorder %s214, 7
      %s216 = scalar_select %p215, %s214, 7
      %s217 = smul.addr %s216, 4
      %s218 = scalar_lea.vmem %s1, %s217
      %p219 = pneg %p74
      %p220 = pneg %p71
      %p221 = scmp.lt.s32.totalorder %s19, 1
      %s222 = scalar_select %p221, %s19, 1
      %s223 = smul.addr %s222, 8
      %s224 = scalar_lea.vmem %s2, %s223
      %p225 = pneg %p100
      %p226 = pneg %p97
      %p227 = scmp.lt.s32.totalorder %s19, 1
      %s228 = scalar_select %p227, %s19, 1
      %s229 = smul.addr %s228, 8
      %s230 = scalar_lea.vmem %s3, %s229
      %p231 = pneg %p126
      %p232 = pneg %p123
      %p233 = pneg %p152
      %p234 = pneg %p149
      %p235 = scmp.lt.s32.totalorder %s19, 1
      %s236 = scalar_select %p235, %s19, 1
      %s237 = smul.addr %s236, 8
      %s238 = scalar_lea.vmem %s4, %s237
      %p239 = scmp.lt.s32.totalorder %s19, 1
      %s240 = scalar_select %p239, %s19, 1
      %s241 = smul.addr %s240, 4
      %s242 = scalar_lea.vmem %s0, %s241
      %s243 = smul.u32 4, %s20
      %p244 = scmp.lt.s32.totalorder %s243, 7
      %s245 = scalar_select %p244, %s243, 7
      %s246 = smul.addr %s245, 4
      %s247 = scalar_lea.vmem %s1, %s246
      %s248 = smul.u32 4, %s20
      %p249 = scmp.lt.s32.totalorder %s19, 1
      %s250 = scalar_select %p249, %s19, 1
      %s251 = smul.addr %s250, 8
      %s252 = scalar_lea.vmem %s2, %s251
      %p253 = scmp.lt.s32.totalorder %s19, 1
      %s254 = scalar_select %p253, %s19, 1
      %s255 = smul.addr %s254, 8
      %s256 = scalar_lea.vmem %s3, %s255
      %p257 = scmp.lt.s32.totalorder %s19, 1
      %s258 = scalar_select %p257, %s19, 1
      %s259 = smul.addr %s258, 8
      %s260 = scalar_lea.vmem %s4, %s259
      %p262 = scmp.eq.s32.totalorder %s20, 0
      // Predicated region
      $region37: #{tpu_custom_call.1} parent=35 // pred_check
        %p263 = pneg %p262
      $region38: #{tpu_custom_call.1} parent=35 // pred_check_branch
        %265 = sbr.rel (%p263) target = $region40
      $region39: #{tpu_custom_call.1} parent=35 // pred_region
        %vm266 = vcmask 7168
        %267 = vst.msk [vmem:[#allocation2] sm:$0xff] %vm266, -1e+30
        %268 = vst.msk [vmem:[#allocation3] sm:$0xff] %vm266, 0.0
        %269 = vst.msk [vmem:[#allocation4] sm:$0xff] %vm266, 0.0
      $region40: #{tpu_custom_call.1} parent=35 // pred_fallthru
        _
      %v270 = vld [vmem:[%s242] sm:$0xf]
      %v271 = vld [vmem:[%s247] sm:$0xf]
      %v272 = vld [vmem:[%s247 + $0x4] sm:$0xf]
      %v273 = vld [vmem:[%s247 + $0x8] sm:$0xf]
      %v274 = vld [vmem:[%s247 + $0xc] sm:$0xf]
      %v279 = vunpack.c.l.b16 %v271
      %v280 = vunpack.c.l.b16 %v272
      %v281 = vunpack.c.l.b16 %v273
      %v282 = vunpack.c.l.b16 %v274
      %v283 = vpack.c.b16 %v280, %v279
      %v284 = vpack.c.b16 %v282, %v281
      %vm285 = vcmask 261120
      %v287 = vsel %vm285, %v270, 0
      %v290 = vsel %vm285, %v283, 0
      %v293 = vsel %vm285, %v284, 0
      %295 = vmatprep.subr.bf16.mxu0 0
      %296 = vmatpush1.bf16.xpose.msra.mxu0 0
      %297 = vmatprep.subr.bf16.mxu0 0
      %298 = vmatpush1.bf16.xpose.msra.mxu0 0
      %299 = vmatprep.subr.bf16.mxu0 0
      %300 = vmatpush1.bf16.xpose.msra.mxu0 0
      %301 = vmatprep.subr.bf16.mxu0 0
      %302 = vmatpush1.bf16.xpose.msra.mxu0 0
      %303 = vmatprep.subr.bf16.mxu0 0
      %304 = vmatpush1.bf16.xpose.msra.mxu0 0
      %305 = vmatprep.subr.bf16.mxu0 0
      %306 = vmatpush1.bf16.xpose.msra.mxu0 0
      %307 = vmatprep.subr.bf16.mxu0 0
      %308 = vmatpush1.bf16.xpose.msra.mxu0 %v293
      %309 = vmatprep.subr.bf16.mxu0 0
      %310 = vmatpush1.bf16.xpose.msra.mxu0 %v290
      %311 = vmatprep.subr.bf16.mxu0 0
      %312 = vmatpush2.bf16.xpose.msra.mxu0 0
      %313 = vmatprep.subr.bf16.mxu0 0
      %314 = vmatpush2.bf16.xpose.msra.mxu0 0
      %315 = vmatprep.subr.bf16.mxu0 0
      %316 = vmatpush2.bf16.xpose.msra.mxu0 0
      %317 = vmatprep.subr.bf16.mxu0 0
      %318 = vmatpush2.bf16.xpose.msra.mxu0 0
      %319 = vmatprep.subr.bf16.mxu0 0
      %320 = vmatpush2.bf16.xpose.msra.mxu0 0
      %321 = vmatprep.subr.bf16.mxu0 0
      %322 = vmatpush2.bf16.xpose.msra.mxu0 0
      %323 = vmatprep.subr.bf16.mxu0 0
      %324 = vmatpush2.bf16.xpose.msra.mxu0 0
      %325 = vmatprep.subr.bf16.mxu0 0
      %326 = vmatpush2.bf16.xpose.msra.mxu0 0
      %327 = vmatprep.mubr.bf16.mxu0 0
      %328 = vmatmul.mubr.bf16.gmra.mxu0 %v287
      %v329 = vpop.f32.mrf.mxu0
      %v330 = vadd.f32 0.0, %v329
      %v331 = vpop.f32.mrf.mxu0
      %v332 = vpop.f32.mrf.mxu0
      %v333 = vpop.f32.mrf.mxu0
      %334 = vdwg.mxu0
      %s335 = smul.u32 %s20, 32
      %v336 = vlaneseq
      %v337 = vand.u32 %v336, 127
      %v338 = vstv %s335
      %v339 = vadd.s32 %v338, %v337
      %vm340 = vcmp.lt.s32.totalorder %v339, 60
      %v341 = vsel %vm340, %v330, -1e+30
      %v342 = vld [vmem:[%s252] sm:$0xff]
      %v343 = vld [vmem:[#allocation4] sm:$0xff]
      %344 = vset.pattern.permute.xlu0 0
      %345 = vperm.xlu0 %344, %v342
      %v346 = vpop.permute.xlu0 %345
      %vm347 = vcmp.eq.s32.totalorder %v339, %v346
      %v348 = vsel %vm347, %v341, 0.0
      %v349 = vsel %vm285, %v348, 0.0
      %350 = vadd.xlane.f32.xlu0 %v349
      %v351 = vpop.xlane.xlu0 %350
      %v352 = vadd.f32 %v343, %v351
      %vm353 = vcmask 7168
      %354 = vst.msk [vmem:[#allocation4] sm:$0xff] %vm353, %v352
      %v355 = vld [vmem:[#allocation2] sm:$0xff]
      %v356 = vsel %vm285, %v341, -inf
      %357 = vmax.xlane.f32.xlu0 %v356
      %v358 = vpop.xlane.xlu0 %357
      %v359 = vmax.f32 %v355, %v358
      %v360 = vld [vmem:[#allocation3] sm:$0xff]
      %v361 = vsub.f32 %v355, %v359
      %v362 = vmul.f32 %v361, 1.442695
      %v363 = vpow.pop %v362
      %v364 = vmul.f32 %v360, %v363
      %366 = vset.pattern.permute.xlu0 0
      %367 = vperm.xlu0 %366, %v359
      %v368 = vpop.permute.xlu0 %367
      %v370 = vsub.f32 %v341, %v368
      %v371 = vmul.f32 %v370, 1.442695
      %v372 = vpow.pop %v371
      %v373 = vsel %vm285, %v372, 0.0
      %374 = vadd.xlane.f32.xlu0 %v373
      %v375 = vpop.xlane.xlu0 %374
      %v376 = vadd.f32 %v364, %v375
      %377 = vst.msk [vmem:[#allocation3] sm:$0xff] %vm353, %v376
      %378 = vst.msk [vmem:[#allocation2] sm:$0xff] %vm353, %v359
      %p379 = scmp.eq.s32.totalorder %s20, 1
      // Predicated region
      $region41: #{tpu_custom_call.1} parent=35 // pred_check
        %p380 = pneg %p379
      $region42: #{tpu_custom_call.1} parent=35 // pred_check_branch
        %382 = sbr.rel (%p380) target = $region44
      $region43: #{tpu_custom_call.1} parent=35 // pred_region
        %v383 = vld [vmem:[%s256] sm:$0xff]
        %vm384 = vcmp.gt.s32.totalorder %v383, 0
        %v385 = vsel %vm384, 1, 0
        %v386 = vcvt.s32.f32 %v385
        %v387 = vld [vmem:[#allocation2] sm:$0xff]
        %v388 = vld [vmem:[#allocation3] sm:$0xff]
        %v389 = vlog2.pop %v388
        %v390 = vmul.f32 %v389, 0.6931472
        %v391 = vadd.f32 %v387, %v390
        %v392 = vld [vmem:[#allocation4] sm:$0xff]
        %v393 = vsub.f32 %v391, %v392
        %v394 = vmul.f32 %v393, %v386
        %395 = vst.msk [vmem:[%s260] sm:$0xff] %vm353, %v394
      $region44: #{tpu_custom_call.1} parent=35 // pred_fallthru
        _
      %p396 = scmp.lt.s32.totalorder %s19, 1
      %s397 = scalar_select %p396, %s19, 1
      %s398 = smul.addr %s397, 8
      %s399 = scalar_lea.vmem %s4, %s398
      // Predicated region
      $region45: #{tpu_custom_call.1} parent=35 // pred_check
        %p400 = pneg %p149
      $region46: #{tpu_custom_call.1} parent=35 // pred_check_branch
        %402 = sbr.rel (%p400) target = $region48
      $region47: #{tpu_custom_call.1} parent=35 // pred_region
        _
      $region48: #{tpu_custom_call.1} parent=35 // pred_fallthru
        _
    $region36: #{tpu_custom_call.1} parent=5 // pred_fallthru
      _
    %p403 = scmp.le.s32.totalorder 2, %s10
    // Predicated region
    $region49: #{tpu_custom_call.1} parent=5 // pred_check
      %p404 = pneg %p403
    $region50: #{tpu_custom_call.1} parent=5 // pred_check_branch
      %406 = sbr.rel (%p404) target = $region52
    $region51: #{tpu_custom_call.1} parent=5 // pred_region
      %s407 = ssub.s32 %s10, 2
      // Predicated region
      $region53: #{tpu_custom_call.1} parent=51 // pred_check
        %p408 = pneg %p155
      $region54: #{tpu_custom_call.1} parent=51 // pred_check_branch
        %410 = sbr.rel (%p408) target = $region56
      $region55: #{tpu_custom_call.1} parent=51 // pred_region
        %p411 = scmp.lt.s32.totalorder %s21, 1
        %s412 = scalar_select %p411, %s21, 1
        %s413 = smul.addr %s412, 8
        %s414 = scalar_lea.vmem %s4, %s413
      $region56: #{tpu_custom_call.1} parent=51 // pred_fallthru
        _
    $region52: #{tpu_custom_call.1} parent=5 // pred_fallthru
      _
  $region6: #{tpu_custom_call.1} parent=0 // loop_footer
    %s14 = sadd.s32 1, %s10
  $region7: #{tpu_custom_call.1} parent=0 // loop_footer_branch
    %9 = sbr.rel target = $region3
  $region8: #{tpu_custom_call.1} parent=0 // loop_exit
    _

</llo_original>
